<compile_context>
chip_gen: v7x
topology: tpu7x:2x2x1
jax: 0.10.0
libtpu: 0.0.40
codegen_flags: <defaults>
</compile_context>

<pallas_src>
import numpy as np
import jax
import jax.numpy as jnp
from jax.experimental import pallas as pl
from jax.experimental.pallas import tpu as pltpu


_VMEM_LIMIT_BYTES = 32 * 1024 * 1024        # safe on v5e / v6e / v7x
_TARGET_BLOCK_BYTES = 2 * 1024 * 1024       # ~2 MiB of (input + output) per step
_KRON_MAX_IN_PIXELS = 512                   # kron matrix = 16*(H*W)^2 B <= 4 MiB


def _align_corners_matrix_np(out_size: int, in_size: int) -> np.ndarray:
    """(out_size, in_size) 1-D linear interpolation matrix, matching PyTorch's
    align_corners=True convention. Each row has at most two non-zeros, sum 1.
    Built with NumPy so it becomes a compile-time constant."""
    if out_size > 1 and in_size > 1:
        scale = (in_size - 1) / (out_size - 1)
    else:
        scale = 0.0
    src = np.arange(out_size, dtype=np.float64) * scale
    i0 = np.clip(np.floor(src), 0, in_size - 1).astype(np.int64)
    i1 = np.clip(i0 + 1, 0, in_size - 1)
    frac = (src - i0).astype(np.float32)
    m = np.zeros((out_size, in_size), dtype=np.float32)
    rows = np.arange(out_size)
    np.add.at(m, (rows, i0), 1.0 - frac)
    np.add.at(m, (rows, i1), frac)
    return m


def _pick_planes_per_block(total_planes: int, per_plane_bytes: int,
                           target_block_bytes: int = _TARGET_BLOCK_BYTES,
                           min_grid: int = 2) -> int:
    """Largest divisor of total_planes such that a block stays near the byte
    target and (when possible) the grid has at least `min_grid` steps."""
    cap = max(1, target_block_bytes // max(per_plane_bytes, 1))
    if total_planes > 1:
        cap = min(cap, max(1, -(-total_planes // min_grid)))  # keep grid >= min_grid
    best = 1
    for d in range(1, total_planes + 1):
        if total_planes % d == 0 and d <= cap:
            best = d
    return best


# ---------------------------------------------------------------------------
# Fused ("kron") kernel: one large MXU matmul per grid step, lane-dense output.
# ---------------------------------------------------------------------------
def _kron_upsample_kernel(x_ref, m_ref, o_ref):
    # x_ref: (BB, H*W)   m_ref: (H*W, H_out*W_out)   o_ref: (BB, H_out*W_out)
    o_ref[...] = jnp.dot(x_ref[...].astype(jnp.float32), m_ref[...],
                         preferred_element_type=jnp.float32).astype(o_ref.dtype)


# ---------------------------------------------------------------------------
# Separable fallback kernel (large planes): out[b] = A_h @ x[b] @ A_w^T.
# ---------------------------------------------------------------------------
def _separable_upsample_kernel(x_ref, ah_ref, awt_ref, o_ref):
    # x_ref: (BB, H, W)  ah_ref: (H_out, H)  awt_ref: (W, W_out)
    # o_ref: (BB, H_out, W_out)
    bb = x_ref.shape[0]
    for b in range(bb):  # static unroll; bb is small in the large-plane regime
        xw = jnp.dot(x_ref[b].astype(jnp.float32), awt_ref[...],
                     preferred_element_type=jnp.float32)       # (H, W_out)
        o_ref[b] = jnp.dot(ah_ref[...], xw,
                           preferred_element_type=jnp.float32).astype(o_ref.dtype)


def up_1_forward(x: jnp.ndarray, force_separable: bool = False) -> jnp.ndarray:
    """Bilinear x2 upsample with align_corners=True, input NCHW."""
    N, C, H, W = x.shape
    H_out, W_out = 2 * H, 2 * W
    B = N * C
    dtype_bytes = jnp.dtype(x.dtype).itemsize
    per_plane_bytes = (H * W + H_out * W_out) * dtype_bytes

    a_h_np = _align_corners_matrix_np(H_out, H)      # (H_out, H)  float32
    a_w_np = _align_corners_matrix_np(W_out, W)      # (W_out, W)  float32

    bb = _pick_planes_per_block(B, per_plane_bytes)
    g = B // bb

    compiler_params = pltpu.CompilerParams(
        dimension_semantics=("parallel",),
        vmem_limit_bytes=_VMEM_LIMIT_BYTES)

    if (H * W <= _KRON_MAX_IN_PIXELS) and not force_separable:
        # M[h*W + w, o*W_out + p] = A_h[o, h] * A_w[p, w]   (kron(A_h, A_w)^T)
        kron_t = jnp.asarray(
            np.einsum('oh,pw->hwop', a_h_np, a_w_np).reshape(H * W, H_out * W_out))

        # Free row-major reshapes: (N,C,H,W) -> (g, bb, H*W)
        x3 = x.reshape(g, bb, H * W)

        out3 = pl.pallas_call(
            _kron_upsample_kernel,
            out_shape=jax.ShapeDtypeStruct((g, bb, H_out * W_out), x.dtype),
            grid_spec=pltpu.PrefetchScalarGridSpec(
                num_scalar_prefetch=0,
                grid=(g,),
                in_specs=[
                    # leading dim squeezed; block covers full (bb, H*W)
                    pl.BlockSpec((None, bb, H * W), lambda i: (i, 0, 0)),
                    # resident weight matrix (constant index_map -> no re-DMA)
                    pl.BlockSpec((H * W, H_out * W_out), lambda i: (0, 0)),
                ],
                out_specs=pl.BlockSpec((None, bb, H_out * W_out),
                                       lambda i: (i, 0, 0)),
            ),
            compiler_params=compiler_params,
        )(x3, kron_t)

        return out3.reshape(N, C, H_out, W_out)

    # ---------------- separable fallback (large planes) ----------------
    a_h = jnp.asarray(a_h_np)                  # (H_out, H)
    a_w_t = jnp.asarray(a_w_np.T.copy())       # (W, W_out)
    x_flat = x.reshape(B, H, W)

    out_flat = pl.pallas_call(
        _separable_upsample_kernel,
        out_shape=jax.ShapeDtypeStruct((B, H_out, W_out), x.dtype),
        grid_spec=pltpu.PrefetchScalarGridSpec(
            num_scalar_prefetch=0,
            grid=(g,),
            in_specs=[
                pl.BlockSpec((bb, H, W), lambda i: (i, 0, 0)),
                pl.BlockSpec((H_out, H), lambda i: (0, 0)),
                pl.BlockSpec((W, W_out), lambda i: (0, 0)),
            ],
            out_specs=pl.BlockSpec((bb, H_out, W_out), lambda i: (i, 0, 0)),
        ),
        compiler_params=compiler_params,
    )(x_flat, a_h, a_w_t)

    return out_flat.reshape(N, C, H_out, W_out)


def _reference_upsample(x: jnp.ndarray) -> jnp.ndarray:
    """Direct (gather-based) bilinear align_corners=True reference in plain JAX."""
    N, C, H, W = x.shape
    H_out, W_out = 2 * H, 2 * W

    def coords(out_size, in_size):
        scale = (in_size - 1) / (out_size - 1) if out_size > 1 and in_size > 1 else 0.0
        src = jnp.arange(out_size, dtype=jnp.float32) * scale
        i0 = jnp.clip(jnp.floor(src), 0, in_size - 1).astype(jnp.int32)
        i1 = jnp.clip(i0 + 1, 0, in_size - 1)
        f = src - i0.astype(jnp.float32)
        return i0, i1, f

    h0, h1, fh = coords(H_out, H)
    w0, w1, fw = coords(W_out, W)
    xf = x.astype(jnp.float32)
    top = xf[:, :, h0, :][:, :, :, w0] * (1 - fw)[None, None, None, :] \
        + xf[:, :, h0, :][:, :, :, w1] * fw[None, None, None, :]
    bot = xf[:, :, h1, :][:, :, :, w0] * (1 - fw)[None, None, None, :] \
        + xf[:, :, h1, :][:, :, :, w1] * fw[None, None, None, :]
    out = top * (1 - fh)[None, None, :, None] + bot * fh[None, None, :, None]
    return out.astype(x.dtype)


if __name__ == "__main__":
    key = jax.random.PRNGKey(0)
    x = jax.random.normal(key, (2, 4, 16, 16), dtype=jnp.float32)

    # Primary (fused kron) path.
    out = up_1_forward(x)
    jax.block_until_ready(out)
    assert out.shape == (2, 4, 32, 32), out.shape

    ref = _reference_upsample(x)
    if not jnp.allclose(out, ref, atol=1e-5, rtol=1e-5):
        raise AssertionError("Pallas (fused) upsample does not match reference")

    # Also exercise the separable fallback path (used for large H/W).
    out_sep = up_1_forward(x, force_separable=True)
    jax.block_until_ready(out_sep)
    if not jnp.allclose(out_sep, ref, atol=1e-5, rtol=1e-5):
        raise AssertionError("Pallas (separable) upsample does not match reference")

    print("KERNEL_OK")
</pallas_src>

<mosaic_0001>
module attributes {stable_mosaic.version = 11 : i64} {
  func.func @_kron_upsample_kernel(%arg0: i32, %arg1: memref<1x4x256xf32, #tpu.memory_space<vmem>>, %arg2: memref<256x1024xf32, #tpu.memory_space<vmem>>, %arg3: memref<1x4x1024xf32, #tpu.memory_space<vmem>>) attributes {dimension_semantics = [#tpu.dimension_semantics<parallel>], iteration_bounds = array<i64: 2>, scalar_prefetch = 0 : i64, scratch_operands = 0 : i64, tpu.core_type = #tpu.core_type<tc>, window_params = [{transform_indices = @transform_0, window_bounds = array<i64: 1, 4, 256>}, {pipeline_mode = #tpu.pipeline_mode<synchronous>, transform_indices = @transform_1, window_bounds = array<i64: 256, 1024>}, {transform_indices = @transform_2, window_bounds = array<i64: 1, 4, 1024>}]} {
    %c0 = arith.constant 0 : index
    %c0_0 = arith.constant 0 : index
    %c0_1 = arith.constant 0 : index
    %0 = vector.load %arg1[%c0, %c0_0, %c0_1] : memref<1x4x256xf32, #tpu.memory_space<vmem>>, vector<1x4x256xf32>
    %1 = vector.shape_cast %0 : vector<1x4x256xf32> to vector<4x256xf32>
    %c0_2 = arith.constant 0 : index
    %c0_3 = arith.constant 0 : index
    %2 = vector.load %arg2[%c0_2, %c0_3] : memref<256x1024xf32, #tpu.memory_space<vmem>>, vector<256x1024xf32>
    %cst = arith.constant dense<0.000000e+00> : vector<4x1024xf32>
    %3 = tpu.matmul %1, %2, %cst {dimension_numbers = #tpu.dot_dimension_numbers<[1], [0], [0], [1], [0, 0, 1, 1], [], []>} : vector<4x256xf32>, vector<256x1024xf32>, vector<4x1024xf32> -> vector<4x1024xf32>
    %c0_4 = arith.constant 0 : index
    %c0_5 = arith.constant 0 : index
    %c0_6 = arith.constant 0 : index
    %4 = vector.load %arg3[%c0_4, %c0_5, %c0_6] : memref<1x4x1024xf32, #tpu.memory_space<vmem>>, vector<1x4x1024xf32>
    %5 = vector.shape_cast %4 : vector<1x4x1024xf32> to vector<4x1024xf32>
    %6 = vector.shape_cast %3 : vector<4x1024xf32> to vector<1x4x1024xf32>
    tpu.vector_store %arg3[%c0_4, %c0_5, %c0_6], %6 {strides = array<i32>} : memref<1x4x1024xf32, #tpu.memory_space<vmem>>, vector<1x4x1024xf32>,
    return
  }
  func.func @transform_0(%arg0: i32) -> (i32, i32, i32) {
    %c0_i32 = arith.constant 0 : i32
    %c0_i32_0 = arith.constant 0 : i32
    %c0_i32_1 = arith.constant 0 : i32
    return %arg0, %c0_i32, %c0_i32_0 : i32, i32, i32
  }
  func.func @transform_1(%arg0: i32) -> (i32, i32) {
    %c0_i32 = arith.constant 0 : i32
    %c0_i32_0 = arith.constant 0 : i32
    %c0_i32_1 = arith.constant 0 : i32
    return %c0_i32, %c0_i32_0 : i32, i32
  }
  func.func @transform_2(%arg0: i32) -> (i32, i32, i32) {
    %c0_i32 = arith.constant 0 : i32
    %c0_i32_0 = arith.constant 0 : i32
    %c0_i32_1 = arith.constant 0 : i32
    return %arg0, %c0_i32, %c0_i32_0 : i32, i32, i32
  }
}

</mosaic_0001>

<llo_original>
// kernel: tpu_custom_call.1
$region0: #{tpu_custom_call.1}
  #allocation0 [shape = 'u32[]', space=smem, size = 0x4, offset = 0x4, fixed_abs, tag = 'smem constant byte address 0x4 - core index']
  #allocation1 [shape = 'u32[144,128]{1,0:T(1,128)}', space=vmem, size = 0x12000, scoped, tag = 'internal scratch']
  %s0 = inlined_call_operand.hbm [shape: f32[2,4,256], index: 0, kind: input, shape index: {}]
  %s1 = inlined_call_operand.hbm [shape: f32[256,1024], index: 1, kind: input, shape index: {}]
  %s2 = inlined_call_operand.hbm [shape: f32[2,4,1024], index: 2, kind: output, shape index: {}]
  %s3 = sld [smem:[#allocation0]]
  $region49: #{tpu_custom_call.1} parent=0
    _
  %s5 = ssub.s32 1, %s3
  %s6 = scalar_select 0, %s5, %s3
  $region1: #{tpu_custom_call.1} parent=0
    #allocation2 [shape = 'u8[8192]{0}', space=vmem, size = 0x2000, scoped, tag = 'input window, operand 0']
    #allocation3 [shape = 's32[2]{0}', space=sflag, size = 0x8, scoped, tag = 'scoped memory for tpu_custom_call.1']
    #allocation4 [shape = 's32[2]{0}', space=sflag, size = 0x8, scoped, tag = 'scoped memory for tpu_custom_call.1']
    #allocation5 [shape = 'u8[1048576]{0}', space=vmem, size = 0x100000, scoped, tag = 'input window, operand 1, single buffered']
    #allocation6 [shape = 's32[1]{0}', space=sflag, size = 0x4, scoped, tag = 'scoped memory for tpu_custom_call.1']
    #allocation7 [shape = 'u8[32768]{0}', space=vmem, size = 0x8000, scoped, tag = 'output window, operand 0']
    %7 = vsyncpa [#allocation3], 0
    %s8 = scalar_lea.sflag [#allocation3], 1
    %9 = vsyncpa %s8, 0
    %10 = vsyncpa [#allocation6], 0
    %11 = vsyncpa [#allocation4], 0
    %s12 = scalar_lea.sflag [#allocation4], 1
    %13 = vsyncpa %s12, 0
    loop: start=0, step=1, limit=4
    $region2: #{tpu_custom_call.1} parent=1 // loop_pre_header
      _
    $region3: #{tpu_custom_call.1} parent=1 // loop_header
      %s15 = sphi 0, %s19
      %p16 = scmp.ge.s32.totalorder %s15, 4
      %s25 = sphi 0, %s27
      %s28 = sphi 0, %s25
      %s29 = sphi 0, %s28
      %s45 = sphi 0, %s29
      %s49 = sphi 0, %s49
      %s51 = sphi 0, %s49
      %s52 = sphi 0, %s51
      %s66 = sphi 0, %s52
      %s72 = sphi 0, %s74
      %s75 = sphi 0, %s72
      %s76 = sphi 0, %s75
      %s92 = sphi 0, %s76
    $region4: #{tpu_custom_call.1} parent=1 // loop_header_branch
      %18 = sbr.rel (%p16) target = $region8
    $region5: #{tpu_custom_call.1} parent=1 // loop_body
      %s20 = ssub.s32 %s15, 1
      %s21 = ssub.s32 %s15, 2
      %s22 = sadd.s32 %s15, 1
      %s23 = ssub.s32 %s15, %s22
      %p24 = scmp.eq.s32.totalorder %s23, 0
      %s26 = sadd.s32 %s25, 1
      %s27 = scalar_select %p24, %s25, %s26
      %p30 = pneg %p24
      %p31 = scmp.eq.s32.totalorder %s15, 1
      %p32 = por %p30, %p31
      %p33 = scmp.ne.s32.totalorder %s25, %s28
      %p34 = scmp.eq.s32.totalorder %s15, 0
      %p35 = por %p33, %p34
      %p36 = scmp.ne.s32.totalorder %s25, %s28
      %p37 = scmp.eq.s32.totalorder %s20, 1
      %p38 = por %p36, %p37
      %p39 = scmp.ne.s32.totalorder %s28, %s29
      %p40 = scmp.eq.s32.totalorder %s20, 0
      %p41 = por %p39, %p40
      %p42 = scmp.ne.s32.totalorder %s28, %s29
      %p43 = scmp.eq.s32.totalorder %s21, 1
      %p44 = por %p42, %p43
      %p46 = scmp.ne.s32.totalorder %s29, %s45
      %p47 = scmp.eq.s32.totalorder %s21, 0
      %p48 = por %p46, %p47
      %s50 = sadd.s32 %s49, 1
      %p53 = scmp.eq.s32.totalorder %s15, 1
      %p54 = scmp.ne.s32.totalorder %s49, %s51
      %p55 = scmp.eq.s32.totalorder %s15, 0
      %p56 = por %p54, %p55
      %p57 = scmp.ne.s32.totalorder %s49, %s51
      %p58 = scmp.eq.s32.totalorder %s20, 1
      %p59 = por %p57, %p58
      %p60 = scmp.ne.s32.totalorder %s51, %s52
      %p61 = scmp.eq.s32.totalorder %s20, 0
      %p62 = por %p60, %p61
      %p63 = scmp.ne.s32.totalorder %s51, %s52
      %p64 = scmp.eq.s32.totalorder %s21, 1
      %p65 = por %p63, %p64
      %p67 = scmp.ne.s32.totalorder %s52, %s66
      %p68 = scmp.eq.s32.totalorder %s21, 0
      %p69 = por %p67, %p68
      %s70 = ssub.s32 %s15, %s22
      %p71 = scmp.eq.s32.totalorder %s70, 0
      %s73 = sadd.s32 %s72, 1
      %s74 = scalar_select %p71, %s72, %s73
      %p77 = pneg %p71
      %p78 = scmp.eq.s32.totalorder %s15, 1
      %p79 = por %p77, %p78
      %p80 = scmp.ne.s32.totalorder %s72, %s75
      %p81 = scmp.eq.s32.totalorder %s15, 0
      %p82 = por %p80, %p81
      %p83 = scmp.ne.s32.totalorder %s72, %s75
      %p84 = scmp.eq.s32.totalorder %s20, 1
      %p85 = por %p83, %p84
      %p86 = scmp.ne.s32.totalorder %s75, %s76
      %p87 = scmp.eq.s32.totalorder %s20, 0
      %p88 = por %p86, %p87
      %p89 = scmp.ne.s32.totalorder %s75, %s76
      %p90 = scmp.eq.s32.totalorder %s21, 1
      %p91 = por %p89, %p90
      %p93 = scmp.ne.s32.totalorder %s76, %s92
      %p94 = scmp.eq.s32.totalorder %s21, 0
      %p95 = por %p93, %p94
      %p96 = scmp.le.s32.totalorder 1, %s15
      %p97 = scmp.lt.s32.totalorder %s15, 3
      %p98 = pnand %p96, %p97
      %p99 = pneg %p98
      // Predicated region
      $region9: #{tpu_custom_call.1} parent=5 // pred_check
        _
      $region10: #{tpu_custom_call.1} parent=5 // pred_check_branch
        %101 = sbr.rel (%p98) target = $region12
      $region11: #{tpu_custom_call.1} parent=5 // pred_region
        %s102 = ssub.s32 %s15, 1
        // Predicated region
        $region13: #{tpu_custom_call.1} parent=11 // pred_check
          %p103 = pneg %p62
        $region14: #{tpu_custom_call.1} parent=11 // pred_check_branch
          %105 = sbr.rel (%p103) target = $region16
        $region15: #{tpu_custom_call.1} parent=11 // pred_region
          %s107 = ssub.s32 32768, 32768
          %108 = vsyncadd [#allocation6], %s107
          %s109 = sshll.u32 [#allocation5], 4
          %s110 = int_to_ptr.vmem [resolvable:$true] %s109
          %115 = dma.hbm_to_vmem [thread:$0]  %s1, 32768, %s110, [#allocation6], 1024, 1024, 64
        $region16: #{tpu_custom_call.1} parent=11 // pred_fallthru
          _
      $region12: #{tpu_custom_call.1} parent=5 // pred_fallthru
        _
      %p116 = scmp.lt.s32.totalorder %s15, 2
      // Predicated region
      $region17: #{tpu_custom_call.1} parent=5 // pred_check
        %p117 = pneg %p116
      $region18: #{tpu_custom_call.1} parent=5 // pred_check_branch
        %119 = sbr.rel (%p117) target = $region20
      $region19: #{tpu_custom_call.1} parent=5 // pred_region
        // Predicated region
        $region21: #{tpu_custom_call.1} parent=19 // pred_check
          %p120 = pneg %p35
        $region22: #{tpu_custom_call.1} parent=19 // pred_check_branch
          %122 = sbr.rel (%p120) target = $region24
        $region23: #{tpu_custom_call.1} parent=19 // pred_region
          %s123 = sand.u32 %s25, 1
          %s124 = scalar_lea.sflag [#allocation3], %s123
          %s125 = sand.u32 %s25, 1
          %s126 = smul.addr %s125, 8
          %s127 = scalar_lea.vmem [#allocation2], %s126
          %s129 = ssub.s32 128, 128
          %130 = vsyncadd %s124, %s129
          %s131 = smul.addr %s15, 2
          %s132 = smul.addr %s131, 64
          %s133 = scalar_lea.hbm %s0, %s132
          %s135 = sshll.u32 %s127, 4
          %s136 = int_to_ptr.vmem [resolvable:$true] %s135
          %138 = dma.hbm_to_vmem [thread:$0]  %s133, 128, %s136, %s124
        $region24: #{tpu_custom_call.1} parent=19 // pred_fallthru
          _
      $region20: #{tpu_custom_call.1} parent=5 // pred_fallthru
        _
      %p139 = scmp.le.s32.totalorder 1, %s15
      %p140 = scmp.lt.s32.totalorder %s15, 3
      %p141 = pnand %p139, %p140
      %p142 = pneg %p141
      // Predicated region
      $region25: #{tpu_custom_call.1} parent=5 // pred_check
        _
      $region26: #{tpu_custom_call.1} parent=5 // pred_check_branch
        %144 = sbr.rel (%p141) target = $region28
      $region27: #{tpu_custom_call.1} parent=5 // pred_region
        %s145 = ssub.s32 %s15, 1
        %s146 = sand.u32 %s28, 1
        %s147 = scalar_lea.sflag [#allocation3], %s146
        %s148 = sand.u32 %s28, 1
        %s149 = smul.addr %s148, 8
        %s150 = scalar_lea.vmem [#allocation2], %s149
        // Predicated region
        $region29: #{tpu_custom_call.1} parent=27 // pred_check
          %p151 = pneg %p41
        $region30: #{tpu_custom_call.1} parent=27 // pred_check_branch
          %153 = sbr.rel (%p151) target = $region32
        $region31: #{tpu_custom_call.1} parent=27 // pred_region
          %154 = dma.done %s147, 128
        $region32: #{tpu_custom_call.1} parent=27 // pred_fallthru
          _
        // Predicated region
        $region33: #{tpu_custom_call.1} parent=27 // pred_check
          %p155 = pneg %p62
        $region34: #{tpu_custom_call.1} parent=27 // pred_check_branch
          %157 = sbr.rel (%p155) target = $region36
        $region35: #{tpu_custom_call.1} parent=27 // pred_region
          %158 = dma.done [#allocation6], 32768
        $region36: #{tpu_custom_call.1} parent=27 // pred_fallthru
          _
        %s159 = sand.u32 %s28, 1
        %s160 = scalar_lea.sflag [#allocation3], %s159
        %s161 = sand.u32 %s28, 1
        %s162 = smul.addr %s161, 8
        %s163 = scalar_lea.vmem [#allocation2], %s162
        %p164 = pneg %p41
        %p165 = pneg %p38
        %p166 = pneg %p62
        %p167 = pneg %p59
        %p168 = pneg %p88
        %p169 = pneg %p85
        %s170 = sand.u32 %s75, 1
        %s171 = scalar_lea.sflag [#allocation4], %s170
        %s172 = sand.u32 %s75, 1
        %s173 = smul.addr %s172, 32
        %s174 = scalar_lea.vmem [#allocation7], %s173
        %v175 = vld [vmem:[%s150] sm:$0xff]
        %v176 = vld [vmem:[#allocation5] sm:$0xff]
        %v177 = vld [vmem:[#allocation5 + $0x8] sm:$0xff]
        %v178 = vld [vmem:[#allocation5 + $0x10] sm:$0xff]
        %v179 = vld [vmem:[#allocation5 + $0x18] sm:$0xff]
        %v180 = vld [vmem:[#allocation5 + $0x20] sm:$0xff]
        %v181 = vld [vmem:[#allocation5 + $0x28] sm:$0xff]
        %v182 = vld [vmem:[#allocation5 + $0x30] sm:$0xff]
        %v183 = vld [vmem:[#allocation5 + $0x38] sm:$0xff]
        %v184 = vld [vmem:[#allocation5 + $0x40] sm:$0xff]
        %v185 = vld [vmem:[#allocation5 + $0x48] sm:$0xff]
        %v186 = vld [vmem:[#allocation5 + $0x50] sm:$0xff]
        %v187 = vld [vmem:[#allocation5 + $0x58] sm:$0xff]
        %v188 = vld [vmem:[#allocation5 + $0x60] sm:$0xff]
        %v189 = vld [vmem:[#allocation5 + $0x68] sm:$0xff]
        %v190 = vld [vmem:[#allocation5 + $0x70] sm:$0xff]
        %v191 = vld [vmem:[#allocation5 + $0x78] sm:$0xff]
        %v192 = vld [vmem:[#allocation5 + $0x80] sm:$0xff]
        %v193 = vld [vmem:[#allocation5 + $0x88] sm:$0xff]
        %v194 = vld [vmem:[#allocation5 + $0x90] sm:$0xff]
        %v195 = vld [vmem:[#allocation5 + $0x98] sm:$0xff]
        %v196 = vld [vmem:[#allocation5 + $0xa0] sm:$0xff]
        %v197 = vld [vmem:[#allocation5 + $0xa8] sm:$0xff]
        %v198 = vld [vmem:[#allocation5 + $0xb0] sm:$0xff]
        %v199 = vld [vmem:[#allocation5 + $0xb8] sm:$0xff]
        %v200 = vld [vmem:[#allocation5 + $0xc0] sm:$0xff]
        %v201 = vld [vmem:[#allocation5 + $0xc8] sm:$0xff]
        %v202 = vld [vmem:[#allocation5 + $0xd0] sm:$0xff]
        %v203 = vld [vmem:[#allocation5 + $0xd8] sm:$0xff]
        %v204 = vld [vmem:[#allocation5 + $0xe0] sm:$0xff]
        %v205 = vld [vmem:[#allocation5 + $0xe8] sm:$0xff]
        %v206 = vld [vmem:[#allocation5 + $0xf0] sm:$0xff]
        %v207 = vld [vmem:[#allocation5 + $0xf8] sm:$0xff]
        %v208 = vld [vmem:[#allocation5 + $0x100] sm:$0xff]
        %v209 = vld [vmem:[#allocation5 + $0x108] sm:$0xff]
        %v210 = vld [vmem:[#allocation5 + $0x110] sm:$0xff]
        %v211 = vld [vmem:[#allocation5 + $0x118] sm:$0xff]
        %v212 = vld [vmem:[#allocation5 + $0x120] sm:$0xff]
        %v213 = vld [vmem:[#allocation5 + $0x128] sm:$0xff]
        %v214 = vld [vmem:[#allocation5 + $0x130] sm:$0xff]
        %v215 = vld [vmem:[#allocation5 + $0x138] sm:$0xff]
        %v216 = vld [vmem:[#allocation5 + $0x140] sm:$0xff]
        %v217 = vld [vmem:[#allocation5 + $0x148] sm:$0xff]
        %v218 = vld [vmem:[#allocation5 + $0x150] sm:$0xff]
        %v219 = vld [vmem:[#allocation5 + $0x158] sm:$0xff]
        %v220 = vld [vmem:[#allocation5 + $0x160] sm:$0xff]
        %v221 = vld [vmem:[#allocation5 + $0x168] sm:$0xff]
        %v222 = vld [vmem:[#allocation5 + $0x170] sm:$0xff]
        %v223 = vld [vmem:[#allocation5 + $0x178] sm:$0xff]
        %v224 = vld [vmem:[#allocation5 + $0x180] sm:$0xff]
        %v225 = vld [vmem:[#allocation5 + $0x188] sm:$0xff]
        %v226 = vld [vmem:[#allocation5 + $0x190] sm:$0xff]
        %v227 = vld [vmem:[#allocation5 + $0x198] sm:$0xff]
        %v228 = vld [vmem:[#allocation5 + $0x1a0] sm:$0xff]
        %v229 = vld [vmem:[#allocation5 + $0x1a8] sm:$0xff]
        %v230 = vld [vmem:[#allocation5 + $0x1b0] sm:$0xff]
        %v231 = vld [vmem:[#allocation5 + $0x1b8] sm:$0xff]
        %v232 = vld [vmem:[#allocation5 + $0x1c0] sm:$0xff]
        %v233 = vld [vmem:[#allocation5 + $0x1c8] sm:$0xff]
        %v234 = vld [vmem:[#allocation5 + $0x1d0] sm:$0xff]
        %v235 = vld [vmem:[#allocation5 + $0x1d8] sm:$0xff]
        %v236 = vld [vmem:[#allocation5 + $0x1e0] sm:$0xff]
        %v237 = vld [vmem:[#allocation5 + $0x1e8] sm:$0xff]
        %v238 = vld [vmem:[#allocation5 + $0x1f0] sm:$0xff]
        %v239 = vld [vmem:[#allocation5 + $0x1f8] sm:$0xff]
        %v240 = vld [vmem:[#allocation5 + $0x200] sm:$0xff]
        %v241 = vld [vmem:[#allocation5 + $0x208] sm:$0xff]
        %v242 = vld [vmem:[#allocation5 + $0x210] sm:$0xff]
        %v243 = vld [vmem:[#allocation5 + $0x218] sm:$0xff]
        %v244 = vld [vmem:[#allocation5 + $0x220] sm:$0xff]
        %v245 = vld [vmem:[#allocation5 + $0x228] sm:$0xff]
        %v246 = vld [vmem:[#allocation5 + $0x230] sm:$0xff]
        %v247 = vld [vmem:[#allocation5 + $0x238] sm:$0xff]
        %v248 = vld [vmem:[#allocation5 + $0x240] sm:$0xff]
        %v249 = vld [vmem:[#allocation5 + $0x248] sm:$0xff]
        %v250 = vld [vmem:[#allocation5 + $0x250] sm:$0xff]
        %v251 = vld [vmem:[#allocation5 + $0x258] sm:$0xff]
        %v252 = vld [vmem:[#allocation5 + $0x260] sm:$0xff]
        %v253 = vld [vmem:[#allocation5 + $0x268] sm:$0xff]
        %v254 = vld [vmem:[#allocation5 + $0x270] sm:$0xff]
        %v255 = vld [vmem:[#allocation5 + $0x278] sm:$0xff]
        %v256 = vld [vmem:[#allocation5 + $0x280] sm:$0xff]
        %v257 = vld [vmem:[#allocation5 + $0x288] sm:$0xff]
        %v258 = vld [vmem:[#allocation5 + $0x290] sm:$0xff]
        %v259 = vld [vmem:[#allocation5 + $0x298] sm:$0xff]
        %v260 = vld [vmem:[#allocation5 + $0x2a0] sm:$0xff]
        %v261 = vld [vmem:[#allocation5 + $0x2a8] sm:$0xff]
        %v262 = vld [vmem:[#allocation5 + $0x2b0] sm:$0xff]
        %v263 = vld [vmem:[#allocation5 + $0x2b8] sm:$0xff]
        %v264 = vld [vmem:[#allocation5 + $0x2c0] sm:$0xff]
        %v265 = vld [vmem:[#allocation5 + $0x2c8] sm:$0xff]
        %v266 = vld [vmem:[#allocation5 + $0x2d0] sm:$0xff]
        %v267 = vld [vmem:[#allocation5 + $0x2d8] sm:$0xff]
        %v268 = vld [vmem:[#allocation5 + $0x2e0] sm:$0xff]
        %v269 = vld [vmem:[#allocation5 + $0x2e8] sm:$0xff]
        %v270 = vld [vmem:[#allocation5 + $0x2f0] sm:$0xff]
        %v271 = vld [vmem:[#allocation5 + $0x2f8] sm:$0xff]
        %v272 = vld [vmem:[#allocation5 + $0x300] sm:$0xff]
        %v273 = vld [vmem:[#allocation5 + $0x308] sm:$0xff]
        %v274 = vld [vmem:[#allocation5 + $0x310] sm:$0xff]
        %v275 = vld [vmem:[#allocation5 + $0x318] sm:$0xff]
        %v276 = vld [vmem:[#allocation5 + $0x320] sm:$0xff]
        %v277 = vld [vmem:[#allocation5 + $0x328] sm:$0xff]
        %v278 = vld [vmem:[#allocation5 + $0x330] sm:$0xff]
        %v279 = vld [vmem:[#allocation5 + $0x338] sm:$0xff]
        %v280 = vld [vmem:[#allocation5 + $0x340] sm:$0xff]
        %v281 = vld [vmem:[#allocation5 + $0x348] sm:$0xff]
        %v282 = vld [vmem:[#allocation5 + $0x350] sm:$0xff]
        %v283 = vld [vmem:[#allocation5 + $0x358] sm:$0xff]
        %v284 = vld [vmem:[#allocation5 + $0x360] sm:$0xff]
        %v285 = vld [vmem:[#allocation5 + $0x368] sm:$0xff]
        %v286 = vld [vmem:[#allocation5 + $0x370] sm:$0xff]
        %v287 = vld [vmem:[#allocation5 + $0x378] sm:$0xff]
        %v288 = vld [vmem:[#allocation5 + $0x380] sm:$0xff]
        %v289 = vld [vmem:[#allocation5 + $0x388] sm:$0xff]
        %v290 = vld [vmem:[#allocation5 + $0x390] sm:$0xff]
        %v291 = vld [vmem:[#allocation5 + $0x398] sm:$0xff]
        %v292 = vld [vmem:[#allocation5 + $0x3a0] sm:$0xff]
        %v293 = vld [vmem:[#allocation5 + $0x3a8] sm:$0xff]
        %v294 = vld [vmem:[#allocation5 + $0x3b0] sm:$0xff]
        %v295 = vld [vmem:[#allocation5 + $0x3b8] sm:$0xff]
        %v296 = vld [vmem:[#allocation5 + $0x3c0] sm:$0xff]
        %v297 = vld [vmem:[#allocation5 + $0x3c8] sm:$0xff]
        %v298 = vld [vmem:[#allocation5 + $0x3d0] sm:$0xff]
        %v299 = vld [vmem:[#allocation5 + $0x3d8] sm:$0xff]
        %v300 = vld [vmem:[#allocation5 + $0x3e0] sm:$0xff]
        %v301 = vld [vmem:[#allocation5 + $0x3e8] sm:$0xff]
        %v302 = vld [vmem:[#allocation5 + $0x3f0] sm:$0xff]
        %v303 = vld [vmem:[#allocation5 + $0x3f8] sm:$0xff]
        %v304 = vld [vmem:[#allocation5 + $0x400] sm:$0xff]
        %v305 = vld [vmem:[#allocation5 + $0x408] sm:$0xff]
        %v306 = vld [vmem:[#allocation5 + $0x410] sm:$0xff]
        %v307 = vld [vmem:[#allocation5 + $0x418] sm:$0xff]
        %v308 = vld [vmem:[#allocation5 + $0x420] sm:$0xff]
        %v309 = vld [vmem:[#allocation5 + $0x428] sm:$0xff]
        %v310 = vld [vmem:[#allocation5 + $0x430] sm:$0xff]
        %v311 = vld [vmem:[#allocation5 + $0x438] sm:$0xff]
        %v312 = vld [vmem:[#allocation5 + $0x440] sm:$0xff]
        %v313 = vld [vmem:[#allocation5 + $0x448] sm:$0xff]
        %v314 = vld [vmem:[#allocation5 + $0x450] sm:$0xff]
        %v315 = vld [vmem:[#allocation5 + $0x458] sm:$0xff]
        %v316 = vld [vmem:[#allocation5 + $0x460] sm:$0xff]
        %v317 = vld [vmem:[#allocation5 + $0x468] sm:$0xff]
        %v318 = vld [vmem:[#allocation5 + $0x470] sm:$0xff]
        %v319 = vld [vmem:[#allocation5 + $0x478] sm:$0xff]
        %v320 = vld [vmem:[#allocation5 + $0x480] sm:$0xff]
        %v321 = vld [vmem:[#allocation5 + $0x488] sm:$0xff]
        %v322 = vld [vmem:[#allocation5 + $0x490] sm:$0xff]
        %v323 = vld [vmem:[#allocation5 + $0x498] sm:$0xff]
        %v324 = vld [vmem:[#allocation5 + $0x4a0] sm:$0xff]
        %v325 = vld [vmem:[#allocation5 + $0x4a8] sm:$0xff]
        %v326 = vld [vmem:[#allocation5 + $0x4b0] sm:$0xff]
        %v327 = vld [vmem:[#allocation5 + $0x4b8] sm:$0xff]
        %v328 = vld [vmem:[#allocation5 + $0x4c0] sm:$0xff]
        %v329 = vld [vmem:[#allocation5 + $0x4c8] sm:$0xff]
        %v330 = vld [vmem:[#allocation5 + $0x4d0] sm:$0xff]
        %v331 = vld [vmem:[#allocation5 + $0x4d8] sm:$0xff]
        %v332 = vld [vmem:[#allocation5 + $0x4e0] sm:$0xff]
        %v333 = vld [vmem:[#allocation5 + $0x4e8] sm:$0xff]
        %v334 = vld [vmem:[#allocation5 + $0x4f0] sm:$0xff]
        %v335 = vld [vmem:[#allocation5 + $0x4f8] sm:$0xff]
        %v336 = vld [vmem:[#allocation5 + $0x500] sm:$0xff]
        %v337 = vld [vmem:[#allocation5 + $0x508] sm:$0xff]
        %v338 = vld [vmem:[#allocation5 + $0x510] sm:$0xff]
        %v339 = vld [vmem:[#allocation5 + $0x518] sm:$0xff]
        %v340 = vld [vmem:[#allocation5 + $0x520] sm:$0xff]
        %v341 = vld [vmem:[#allocation5 + $0x528] sm:$0xff]
        %v342 = vld [vmem:[#allocation5 + $0x530] sm:$0xff]
        %v343 = vld [vmem:[#allocation5 + $0x538] sm:$0xff]
        %v344 = vld [vmem:[#allocation5 + $0x540] sm:$0xff]
        %v345 = vld [vmem:[#allocation5 + $0x548] sm:$0xff]
        %v346 = vld [vmem:[#allocation5 + $0x550] sm:$0xff]
        %v347 = vld [vmem:[#allocation5 + $0x558] sm:$0xff]
        %v348 = vld [vmem:[#allocation5 + $0x560] sm:$0xff]
        %v349 = vld [vmem:[#allocation5 + $0x568] sm:$0xff]
        %v350 = vld [vmem:[#allocation5 + $0x570] sm:$0xff]
        %v351 = vld [vmem:[#allocation5 + $0x578] sm:$0xff]
        %v352 = vld [vmem:[#allocation5 + $0x580] sm:$0xff]
        %v353 = vld [vmem:[#allocation5 + $0x588] sm:$0xff]
        %v354 = vld [vmem:[#allocation5 + $0x590] sm:$0xff]
        %v355 = vld [vmem:[#allocation5 + $0x598] sm:$0xff]
        %v356 = vld [vmem:[#allocation5 + $0x5a0] sm:$0xff]
        %v357 = vld [vmem:[#allocation5 + $0x5a8] sm:$0xff]
        %v358 = vld [vmem:[#allocation5 + $0x5b0] sm:$0xff]
        %v359 = vld [vmem:[#allocation5 + $0x5b8] sm:$0xff]
        %v360 = vld [vmem:[#allocation5 + $0x5c0] sm:$0xff]
        %v361 = vld [vmem:[#allocation5 + $0x5c8] sm:$0xff]
        %v362 = vld [vmem:[#allocation5 + $0x5d0] sm:$0xff]
        %v363 = vld [vmem:[#allocation5 + $0x5d8] sm:$0xff]
        %v364 = vld [vmem:[#allocation5 + $0x5e0] sm:$0xff]
        %v365 = vld [vmem:[#allocation5 + $0x5e8] sm:$0xff]
        %v366 = vld [vmem:[#allocation5 + $0x5f0] sm:$0xff]
        %v367 = vld [vmem:[#allocation5 + $0x5f8] sm:$0xff]
        %v368 = vld [vmem:[#allocation5 + $0x600] sm:$0xff]
        %v369 = vld [vmem:[#allocation5 + $0x608] sm:$0xff]
        %v370 = vld [vmem:[#allocation5 + $0x610] sm:$0xff]
        %v371 = vld [vmem:[#allocation5 + $0x618] sm:$0xff]
        %v372 = vld [vmem:[#allocation5 + $0x620] sm:$0xff]
        %v373 = vld [vmem:[#allocation5 + $0x628] sm:$0xff]
        %v374 = vld [vmem:[#allocation5 + $0x630] sm:$0xff]
        %v375 = vld [vmem:[#allocation5 + $0x638] sm:$0xff]
        %v376 = vld [vmem:[#allocation5 + $0x640] sm:$0xff]
        %v377 = vld [vmem:[#allocation5 + $0x648] sm:$0xff]
        %v378 = vld [vmem:[#allocation5 + $0x650] sm:$0xff]
        %v379 = vld [vmem:[#allocation5 + $0x658] sm:$0xff]
        %v380 = vld [vmem:[#allocation5 + $0x660] sm:$0xff]
        %v381 = vld [vmem:[#allocation5 + $0x668] sm:$0xff]
        %v382 = vld [vmem:[#allocation5 + $0x670] sm:$0xff]
        %v383 = vld [vmem:[#allocation5 + $0x678] sm:$0xff]
        %v384 = vld [vmem:[#allocation5 + $0x680] sm:$0xff]
        %v385 = vld [vmem:[#allocation5 + $0x688] sm:$0xff]
        %v386 = vld [vmem:[#allocation5 + $0x690] sm:$0xff]
        %v387 = vld [vmem:[#allocation5 + $0x698] sm:$0xff]
        %v388 = vld [vmem:[#allocation5 + $0x6a0] sm:$0xff]
        %v389 = vld [vmem:[#allocation5 + $0x6a8] sm:$0xff]
        %v390 = vld [vmem:[#allocation5 + $0x6b0] sm:$0xff]
        %v391 = vld [vmem:[#allocation5 + $0x6b8] sm:$0xff]
        %v392 = vld [vmem:[#allocation5 + $0x6c0] sm:$0xff]
        %v393 = vld [vmem:[#allocation5 + $0x6c8] sm:$0xff]
        %v394 = vld [vmem:[#allocation5 + $0x6d0] sm:$0xff]
        %v395 = vld [vmem:[#allocation5 + $0x6d8] sm:$0xff]
        %v396 = vld [vmem:[#allocation5 + $0x6e0] sm:$0xff]
        %v397 = vld [vmem:[#allocation5 + $0x6e8] sm:$0xff]
        %v398 = vld [vmem:[#allocation5 + $0x6f0] sm:$0xff]
        %v399 = vld [vmem:[#allocation5 + $0x6f8] sm:$0xff]
        %v400 = vld [vmem:[#allocation5 + $0x700] sm:$0xff]
        %v401 = vld [vmem:[#allocation5 + $0x708] sm:$0xff]
        %v402 = vld [vmem:[#allocation5 + $0x710] sm:$0xff]
        %v403 = vld [vmem:[#allocation5 + $0x718] sm:$0xff]
        %v404 = vld [vmem:[#allocation5 + $0x720] sm:$0xff]
        %v405 = vld [vmem:[#allocation5 + $0x728] sm:$0xff]
        %v406 = vld [vmem:[#allocation5 + $0x730] sm:$0xff]
        %v407 = vld [vmem:[#allocation5 + $0x738] sm:$0xff]
        %v408 = vld [vmem:[#allocation5 + $0x740] sm:$0xff]
        %v409 = vld [vmem:[#allocation5 + $0x748] sm:$0xff]
        %v410 = vld [vmem:[#allocation5 + $0x750] sm:$0xff]
        %v411 = vld [vmem:[#allocation5 + $0x758] sm:$0xff]
        %v412 = vld [vmem:[#allocation5 + $0x760] sm:$0xff]
        %v413 = vld [vmem:[#allocation5 + $0x768] sm:$0xff]
        %v414 = vld [vmem:[#allocation5 + $0x770] sm:$0xff]
        %v415 = vld [vmem:[#allocation5 + $0x778] sm:$0xff]
        %v416 = vld [vmem:[#allocation5 + $0x780] sm:$0xff]
        %v417 = vld [vmem:[#allocation5 + $0x788] sm:$0xff]
        %v418 = vld [vmem:[#allocation5 + $0x790] sm:$0xff]
        %v419 = vld [vmem:[#allocation5 + $0x798] sm:$0xff]
        %v420 = vld [vmem:[#allocation5 + $0x7a0] sm:$0xff]
        %v421 = vld [vmem:[#allocation5 + $0x7a8] sm:$0xff]
        %v422 = vld [vmem:[#allocation5 + $0x7b0] sm:$0xff]
        %v423 = vld [vmem:[#allocation5 + $0x7b8] sm:$0xff]
        %v424 = vld [vmem:[#allocation5 + $0x7c0] sm:$0xff]
        %v425 = vld [vmem:[#allocation5 + $0x7c8] sm:$0xff]
        %v426 = vld [vmem:[#allocation5 + $0x7d0] sm:$0xff]
        %v427 = vld [vmem:[#allocation5 + $0x7d8] sm:$0xff]
        %v428 = vld [vmem:[#allocation5 + $0x7e0] sm:$0xff]
        %v429 = vld [vmem:[#allocation5 + $0x7e8] sm:$0xff]
        %v430 = vld [vmem:[#allocation5 + $0x7f0] sm:$0xff]
        %v431 = vld [vmem:[#allocation5 + $0x7f8] sm:$0xff]
        %v433 = vcombine.high %v175, %v175
        %435 = vmatprep.subr.mxu0 %v177
        %436 = vmatpush1.msra.mxu0 %v176
        %437 = vmatprep.subr.mxu0 %v185
        %438 = vmatpush1.msra.mxu0 %v184
        %439 = vmatprep.subr.mxu0 %v193
        %440 = vmatpush1.msra.mxu0 %v192
        %441 = vmatprep.subr.mxu0 %v201
        %442 = vmatpush1.msra.mxu0 %v200
        %443 = vmatprep.subr.mxu0 %v209
        %444 = vmatpush1.msra.mxu0 %v208
        %445 = vmatprep.subr.mxu0 %v217
        %446 = vmatpush1.msra.mxu0 %v216
        %447 = vmatprep.subr.mxu0 %v225
        %448 = vmatpush1.msra.mxu0 %v224
        %449 = vmatprep.subr.mxu0 %v233
        %450 = vmatpush1.msra.mxu0 %v232
        %451 = vmatprep.subr.mxu0 %v241
        %452 = vmatpush1.msra.mxu0 %v240
        %453 = vmatprep.subr.mxu0 %v249
        %454 = vmatpush1.msra.mxu0 %v248
        %455 = vmatprep.subr.mxu0 %v257
        %456 = vmatpush1.msra.mxu0 %v256
        %457 = vmatprep.subr.mxu0 %v265
        %458 = vmatpush1.msra.mxu0 %v264
        %459 = vmatprep.subr.mxu0 %v273
        %460 = vmatpush1.msra.mxu0 %v272
        %461 = vmatprep.subr.mxu0 %v281
        %462 = vmatpush1.msra.mxu0 %v280
        %463 = vmatprep.subr.mxu0 %v289
        %464 = vmatpush1.msra.mxu0 %v288
        %465 = vmatprep.subr.mxu0 %v297
        %466 = vmatpush1.msra.mxu0 %v296
        %467 = vmatprep.subr.mxu0 %v305
        %468 = vmatpush1.msra.mxu0 %v304
        %469 = vmatprep.subr.mxu0 %v313
        %470 = vmatpush1.msra.mxu0 %v312
        %471 = vmatprep.subr.mxu0 %v321
        %472 = vmatpush1.msra.mxu0 %v320
        %473 = vmatprep.subr.mxu0 %v329
        %474 = vmatpush1.msra.mxu0 %v328
        %475 = vmatprep.subr.mxu0 %v337
        %476 = vmatpush1.msra.mxu0 %v336
        %477 = vmatprep.subr.mxu0 %v345
        %478 = vmatpush1.msra.mxu0 %v344
        %479 = vmatprep.subr.mxu0 %v353
        %480 = vmatpush1.msra.mxu0 %v352
        %481 = vmatprep.subr.mxu0 %v361
        %482 = vmatpush1.msra.mxu0 %v360
        %483 = vmatprep.subr.mxu0 %v369
        %484 = vmatpush1.msra.mxu0 %v368
        %485 = vmatprep.subr.mxu0 %v377
        %486 = vmatpush1.msra.mxu0 %v376
        %487 = vmatprep.subr.mxu0 %v385
        %488 = vmatpush1.msra.mxu0 %v384
        %489 = vmatprep.subr.mxu0 %v393
        %490 = vmatpush1.msra.mxu0 %v392
        %491 = vmatprep.subr.mxu0 %v401
        %492 = vmatpush1.msra.mxu0 %v400
        %493 = vmatprep.subr.mxu0 %v409
        %494 = vmatpush1.msra.mxu0 %v408
        %495 = vmatprep.subr.mxu0 %v417
        %496 = vmatpush1.msra.mxu0 %v416
        %497 = vmatprep.subr.mxu0 %v425
        %498 = vmatpush1.msra.mxu0 %v424
        %499 = vmatprep.mubr.f32.mxu0 %v433
        %500 = vmatmul.mubr.f32.gmra.mrb[0].mxu0 %v175
        %v501 = vpop.f32.mrb[0].mxu0
        %v502 = vadd.f32 0.0, %v501
        %v503 = vpop.f32.mrb[0].mxu0
        %v504 = vadd.f32 0.0, %v503
        %505 = vdwg.mxu0
        %506 = vmatprep.subr.mxu0 %v179
        %507 = vmatpush1.msra.mxu0 %v178
        %508 = vmatprep.subr.mxu0 %v187
        %509 = vmatpush1.msra.mxu0 %v186
        %510 = vmatprep.subr.mxu0 %v195
        %511 = vmatpush1.msra.mxu0 %v194
        %512 = vmatprep.subr.mxu0 %v203
        %513 = vmatpush1.msra.mxu0 %v202
        %514 = vmatprep.subr.mxu0 %v211
        %515 = vmatpush1.msra.mxu0 %v210
        %516 = vmatprep.subr.mxu0 %v219
        %517 = vmatpush1.msra.mxu0 %v218
        %518 = vmatprep.subr.mxu0 %v227
        %519 = vmatpush1.msra.mxu0 %v226
        %520 = vmatprep.subr.mxu0 %v235
        %521 = vmatpush1.msra.mxu0 %v234
        %522 = vmatprep.subr.mxu0 %v243
        %523 = vmatpush1.msra.mxu0 %v242
        %524 = vmatprep.subr.mxu0 %v251
        %525 = vmatpush1.msra.mxu0 %v250
        %526 = vmatprep.subr.mxu0 %v259
        %527 = vmatpush1.msra.mxu0 %v258
        %528 = vmatprep.subr.mxu0 %v267
        %529 = vmatpush1.msra.mxu0 %v266
        %530 = vmatprep.subr.mxu0 %v275
        %531 = vmatpush1.msra.mxu0 %v274
        %532 = vmatprep.subr.mxu0 %v283
        %533 = vmatpush1.msra.mxu0 %v282
        %534 = vmatprep.subr.mxu0 %v291
        %535 = vmatpush1.msra.mxu0 %v290
        %536 = vmatprep.subr.mxu0 %v299
        %537 = vmatpush1.msra.mxu0 %v298
        %538 = vmatprep.subr.mxu0 %v307
        %539 = vmatpush1.msra.mxu0 %v306
        %540 = vmatprep.subr.mxu0 %v315
        %541 = vmatpush1.msra.mxu0 %v314
        %542 = vmatprep.subr.mxu0 %v323
        %543 = vmatpush1.msra.mxu0 %v322
        %544 = vmatprep.subr.mxu0 %v331
        %545 = vmatpush1.msra.mxu0 %v330
        %546 = vmatprep.subr.mxu0 %v339
        %547 = vmatpush1.msra.mxu0 %v338
        %548 = vmatprep.subr.mxu0 %v347
        %549 = vmatpush1.msra.mxu0 %v346
        %550 = vmatprep.subr.mxu0 %v355
        %551 = vmatpush1.msra.mxu0 %v354
        %552 = vmatprep.subr.mxu0 %v363
        %553 = vmatpush1.msra.mxu0 %v362
        %554 = vmatprep.subr.mxu0 %v371
        %555 = vmatpush1.msra.mxu0 %v370
        %556 = vmatprep.subr.mxu0 %v379
        %557 = vmatpush1.msra.mxu0 %v378
        %558 = vmatprep.subr.mxu0 %v387
        %559 = vmatpush1.msra.mxu0 %v386
        %560 = vmatprep.subr.mxu0 %v395
        %561 = vmatpush1.msra.mxu0 %v394
        %562 = vmatprep.subr.mxu0 %v403
        %563 = vmatpush1.msra.mxu0 %v402
        %564 = vmatprep.subr.mxu0 %v411
        %565 = vmatpush1.msra.mxu0 %v410
        %566 = vmatprep.subr.mxu0 %v419
        %567 = vmatpush1.msra.mxu0 %v418
        %568 = vmatprep.subr.mxu0 %v427
        %569 = vmatpush1.msra.mxu0 %v426
        %570 = vmatprep.mubr.f32.mxu0 %v433
        %571 = vmatmul.mubr.f32.gmra.mrb[0].mxu0 %v175
        %v572 = vpop.f32.mrb[0].mxu0
        %v573 = vadd.f32 0.0, %v572
        %v574 = vpop.f32.mrb[0].mxu0
        %v575 = vadd.f32 0.0, %v574
        %576 = vdwg.mxu0
        %577 = vmatprep.subr.mxu0 %v181
        %578 = vmatpush1.msra.mxu0 %v180
        %579 = vmatprep.subr.mxu0 %v189
        %580 = vmatpush1.msra.mxu0 %v188
        %581 = vmatprep.subr.mxu0 %v197
        %582 = vmatpush1.msra.mxu0 %v196
        %583 = vmatprep.subr.mxu0 %v205
        %584 = vmatpush1.msra.mxu0 %v204
        %585 = vmatprep.subr.mxu0 %v213
        %586 = vmatpush1.msra.mxu0 %v212
        %587 = vmatprep.subr.mxu0 %v221
        %588 = vmatpush1.msra.mxu0 %v220
        %589 = vmatprep.subr.mxu0 %v229
        %590 = vmatpush1.msra.mxu0 %v228
        %591 = vmatprep.subr.mxu0 %v237
        %592 = vmatpush1.msra.mxu0 %v236
        %593 = vmatprep.subr.mxu0 %v245
        %594 = vmatpush1.msra.mxu0 %v244
        %595 = vmatprep.subr.mxu0 %v253
        %596 = vmatpush1.msra.mxu0 %v252
        %597 = vmatprep.subr.mxu0 %v261
        %598 = vmatpush1.msra.mxu0 %v260
        %599 = vmatprep.subr.mxu0 %v269
        %600 = vmatpush1.msra.mxu0 %v268
        %601 = vmatprep.subr.mxu0 %v277
        %602 = vmatpush1.msra.mxu0 %v276
        %603 = vmatprep.subr.mxu0 %v285
        %604 = vmatpush1.msra.mxu0 %v284
        %605 = vmatprep.subr.mxu0 %v293
        %606 = vmatpush1.msra.mxu0 %v292
        %607 = vmatprep.subr.mxu0 %v301
        %608 = vmatpush1.msra.mxu0 %v300
        %609 = vmatprep.subr.mxu0 %v309
        %610 = vmatpush1.msra.mxu0 %v308
        %611 = vmatprep.subr.mxu0 %v317
        %612 = vmatpush1.msra.mxu0 %v316
        %613 = vmatprep.subr.mxu0 %v325
        %614 = vmatpush1.msra.mxu0 %v324
        %615 = vmatprep.subr.mxu0 %v333
        %616 = vmatpush1.msra.mxu0 %v332
        %617 = vmatprep.subr.mxu0 %v341
        %618 = vmatpush1.msra.mxu0 %v340
        %619 = vmatprep.subr.mxu0 %v349
        %620 = vmatpush1.msra.mxu0 %v348
        %621 = vmatprep.subr.mxu0 %v357
        %622 = vmatpush1.msra.mxu0 %v356
        %623 = vmatprep.subr.mxu0 %v365
        %624 = vmatpush1.msra.mxu0 %v364
        %625 = vmatprep.subr.mxu0 %v373
        %626 = vmatpush1.msra.mxu0 %v372
        %627 = vmatprep.subr.mxu0 %v381
        %628 = vmatpush1.msra.mxu0 %v380
        %629 = vmatprep.subr.mxu0 %v389
        %630 = vmatpush1.msra.mxu0 %v388
        %631 = vmatprep.subr.mxu0 %v397
        %632 = vmatpush1.msra.mxu0 %v396
        %633 = vmatprep.subr.mxu0 %v405
        %634 = vmatpush1.msra.mxu0 %v404
        %635 = vmatprep.subr.mxu0 %v413
        %636 = vmatpush1.msra.mxu0 %v412
        %637 = vmatprep.subr.mxu0 %v421
        %638 = vmatpush1.msra.mxu0 %v420
        %639 = vmatprep.subr.mxu0 %v429
        %640 = vmatpush1.msra.mxu0 %v428
        %641 = vmatprep.mubr.f32.mxu0 %v433
        %642 = vmatmul.mubr.f32.gmra.mrb[0].mxu0 %v175
        %v643 = vpop.f32.mrb[0].mxu0
        %v644 = vadd.f32 0.0, %v643
        %v645 = vpop.f32.mrb[0].mxu0
        %v646 = vadd.f32 0.0, %v645
        %647 = vdwg.mxu0
        %648 = vmatprep.subr.mxu0 %v183
        %649 = vmatpush1.msra.mxu0 %v182
        %650 = vmatprep.subr.mxu0 %v191
        %651 = vmatpush1.msra.mxu0 %v190
        %652 = vmatprep.subr.mxu0 %v199
        %653 = vmatpush1.msra.mxu0 %v198
        %654 = vmatprep.subr.mxu0 %v207
        %655 = vmatpush1.msra.mxu0 %v206
        %656 = vmatprep.subr.mxu0 %v215
        %657 = vmatpush1.msra.mxu0 %v214
        %658 = vmatprep.subr.mxu0 %v223
        %659 = vmatpush1.msra.mxu0 %v222
        %660 = vmatprep.subr.mxu0 %v231
        %661 = vmatpush1.msra.mxu0 %v230
        %662 = vmatprep.subr.mxu0 %v239
        %663 = vmatpush1.msra.mxu0 %v238
        %664 = vmatprep.subr.mxu0 %v247
        %665 = vmatpush1.msra.mxu0 %v246
        %666 = vmatprep.subr.mxu0 %v255
        %667 = vmatpush1.msra.mxu0 %v254
        %668 = vmatprep.subr.mxu0 %v263
        %669 = vmatpush1.msra.mxu0 %v262
        %670 = vmatprep.subr.mxu0 %v271
        %671 = vmatpush1.msra.mxu0 %v270
        %672 = vmatprep.subr.mxu0 %v279
        %673 = vmatpush1.msra.mxu0 %v278
        %674 = vmatprep.subr.mxu0 %v287
        %675 = vmatpush1.msra.mxu0 %v286
        %676 = vmatprep.subr.mxu0 %v295
        %677 = vmatpush1.msra.mxu0 %v294
        %678 = vmatprep.subr.mxu0 %v303
        %679 = vmatpush1.msra.mxu0 %v302
        %680 = vmatprep.subr.mxu0 %v311
        %681 = vmatpush1.msra.mxu0 %v310
        %682 = vmatprep.subr.mxu0 %v319
        %683 = vmatpush1.msra.mxu0 %v318
        %684 = vmatprep.subr.mxu0 %v327
        %685 = vmatpush1.msra.mxu0 %v326
        %686 = vmatprep.subr.mxu0 %v335
        %687 = vmatpush1.msra.mxu0 %v334
        %688 = vmatprep.subr.mxu0 %v343
        %689 = vmatpush1.msra.mxu0 %v342
        %690 = vmatprep.subr.mxu0 %v351
        %691 = vmatpush1.msra.mxu0 %v350
        %692 = vmatprep.subr.mxu0 %v359
        %693 = vmatpush1.msra.mxu0 %v358
        %694 = vmatprep.subr.mxu0 %v367
        %695 = vmatpush1.msra.mxu0 %v366
        %696 = vmatprep.subr.mxu0 %v375
        %697 = vmatpush1.msra.mxu0 %v374
        %698 = vmatprep.subr.mxu0 %v383
        %699 = vmatpush1.msra.mxu0 %v382
        %700 = vmatprep.subr.mxu0 %v391
        %701 = vmatpush1.msra.mxu0 %v390
        %702 = vmatprep.subr.mxu0 %v399
        %703 = vmatpush1.msra.mxu0 %v398
        %704 = vmatprep.subr.mxu0 %v407
        %705 = vmatpush1.msra.mxu0 %v406
        %706 = vmatprep.subr.mxu0 %v415
        %707 = vmatpush1.msra.mxu0 %v414
        %708 = vmatprep.subr.mxu0 %v423
        %709 = vmatpush1.msra.mxu0 %v422
        %710 = vmatprep.subr.mxu0 %v431
        %711 = vmatpush1.msra.mxu0 %v430
        %712 = vmatprep.mubr.f32.mxu0 %v433
        %713 = vmatmul.mubr.f32.gmra.mrb[0].mxu0 %v175
        %v714 = vpop.f32.mrb[0].mxu0
        %v715 = vadd.f32 0.0, %v714
        %v716 = vpop.f32.mrb[0].mxu0
        %v717 = vadd.f32 0.0, %v716
        %718 = vdwg.mxu0
        %v727 = vcombine.low %v502, %v504
        %v728 = vcombine.low %v573, %v575
        %v729 = vcombine.low %v644, %v646
        %v730 = vcombine.low %v715, %v717
        %735 = vst [vmem:[%s174] sm:$0xff] %v727
        %736 = vst [vmem:[%s174 + $0x8] sm:$0xff] %v728
        %737 = vst [vmem:[%s174 + $0x10] sm:$0xff] %v729
        %738 = vst [vmem:[%s174 + $0x18] sm:$0xff] %v730
        %s739 = sand.u32 %s75, 1
        %s740 = scalar_lea.sflag [#allocation4], %s739
        %s741 = sand.u32 %s75, 1
        %s742 = smul.addr %s741, 32
        %s743 = scalar_lea.vmem [#allocation7], %s742
        // Predicated region
        $region37: #{tpu_custom_call.1} parent=27 // pred_check
          %p744 = pneg %p85
        $region38: #{tpu_custom_call.1} parent=27 // pred_check_branch
          %746 = sbr.rel (%p744) target = $region40
        $region39: #{tpu_custom_call.1} parent=27 // pred_region
          %s748 = ssub.s32 512, 512
          %749 = vsyncadd %s740, %s748
          %s750 = smul.addr %s20, 8
          %s751 = smul.addr %s750, 64
          %s752 = scalar_lea.hbm %s2, %s751
          %s754 = sshll.u32 %s743, 4
          %s755 = int_to_ptr.vmem [resolvable:$true] %s754
          %757 = dma.vmem_to_hbm [thread:$0]  %s755, 512, %s752, %s740
        $region40: #{tpu_custom_call.1} parent=27 // pred_fallthru
          _
      $region28: #{tpu_custom_call.1} parent=5 // pred_fallthru
        _
      %p758 = scmp.le.s32.totalorder 2, %s15
      // Predicated region
      $region41: #{tpu_custom_call.1} parent=5 // pred_check
        %p759 = pneg %p758
      $region42: #{tpu_custom_call.1} parent=5 // pred_check_branch
        %761 = sbr.rel (%p759) target = $region44
      $region43: #{tpu_custom_call.1} parent=5 // pred_region
        %s762 = ssub.s32 %s15, 2
        // Predicated region
        $region45: #{tpu_custom_call.1} parent=43 // pred_check
          %p763 = pneg %p91
        $region46: #{tpu_custom_call.1} parent=43 // pred_check_branch
          %765 = sbr.rel (%p763) target = $region48
        $region47: #{tpu_custom_call.1} parent=43 // pred_region
          %s766 = sand.u32 %s76, 1
          %s767 = scalar_lea.sflag [#allocation4], %s766
          %s768 = sand.u32 %s76, 1
          %s769 = smul.addr %s768, 32
          %s770 = scalar_lea.vmem [#allocation7], %s769
          %771 = dma.done %s767, 512
        $region48: #{tpu_custom_call.1} parent=43 // pred_fallthru
          _
      $region44: #{tpu_custom_call.1} parent=5 // pred_fallthru
        _
    $region6: #{tpu_custom_call.1} parent=1 // loop_footer
      %s19 = sadd.s32 1, %s15
    $region7: #{tpu_custom_call.1} parent=1 // loop_footer_branch
      %14 = sbr.rel target = $region3
    $region8: #{tpu_custom_call.1} parent=1 // loop_exit
      _
    %772 = vsyncpa [#allocation3], 1
    %s773 = scalar_lea.sflag [#allocation3], 1
    %774 = vsyncpa %s773, 1
    %775 = vsyncpa [#allocation6], 1
    %776 = vsyncpa [#allocation4], 1
    %s777 = scalar_lea.sflag [#allocation4], 1
    %778 = vsyncpa %s777, 1

</llo_original>
